<compile_context>
chip_gen: v7x
topology: tpu7x:2x2x1
jax: 0.10.0
libtpu: 0.0.40
codegen_flags: <defaults>
</compile_context>

<pallas_src>
import functools

import jax
import jax.numpy as jnp
from jax.experimental import pallas as pl
from jax.experimental.pallas import tpu as pltpu

_LANE = 128
_SUBLANE = 8


def _round_up(x, m):
    return ((x + m - 1) // m) * m


def _cdiv(a, b):
    return (a + b - 1) // b


# ---------------------------------------------------------------------------
# Fused Pallas kernel: full VAE forward for one batch tile.
# Every Linear+BN pair arrives pre-folded (eval BN), pre-transposed and padded
# per-layer ([Din_pad, Dout_pad], bf16), so a layer is one MXU matmul (bf16
# operands, f32 accumulate) + f32 bias + activation.  Dropout is identity.
# refs = (x, eps, w0, b0, w1, b1, ..., mean, log_var, z, recon)
# ---------------------------------------------------------------------------
def _vae_forward_kernel(*refs, n_enc: int, n_dec: int):
    n_layers = n_enc + 2 + n_dec
    x_ref, eps_ref = refs[0], refs[1]
    wb = refs[2:2 + 2 * n_layers]
    mean_ref, logvar_ref, z_ref, recon_ref = refs[2 + 2 * n_layers:]
    f32, bf16 = jnp.float32, jnp.bfloat16

    def layer(h, k):
        # bf16 operands for MXU peak; f32 accumulation; f32 bias add.
        return jnp.dot(h.astype(bf16), wb[2 * k][...],
                       preferred_element_type=f32) + wb[2 * k + 1][...]

    # ---- encoder hidden stack: Linear -> BN(folded) -> ReLU -> Dropout(id) --
    h = x_ref[...]
    k = 0
    for _ in range(n_enc):                                      # static unroll
        h = jnp.maximum(layer(h, k), 0.0)
        k += 1

    # ---- latent heads (Linear -> BN, no activation). Store immediately so
    # mean/log_var do not stay live through the decoder (vreg pressure). ------
    mean = layer(h, k); k += 1
    log_var = layer(h, k); k += 1
    mean_ref[...] = mean
    logvar_ref[...] = log_var

    # ---- reparameterization: z = mean + eps * exp(0.5*log_var)  (EUP exp) ---
    z = mean + eps_ref[...] * jnp.exp(0.5 * log_var)
    z_ref[...] = z

    # ---- decoder stack: ReLU layers, final layer Sigmoid --------------------
    h = z
    for l in range(n_dec):                                      # static unroll
        y = layer(h, k); k += 1
        h = jnp.maximum(y, 0.0) if l < n_dec - 1 else jax.nn.sigmoid(y)
    recon_ref[...] = h


# ---------------------------------------------------------------------------
# Parameter construction (deterministic, mimics PyTorch init; BN folded).
# ---------------------------------------------------------------------------
def _make_linear_bn(key, d_in, d_out, eps=1e-5):
    """Linear(d_in,d_out) + BatchNorm1d(d_out), folded for eval mode.
    Returns (wt, b) with wt: [d_in, d_out] (pre-transposed) so y = x @ wt + b."""
    k_w, k_b, k_g, k_be, k_m, k_v = jax.random.split(key, 6)
    bound = 1.0 / jnp.sqrt(jnp.float32(d_in))
    w = jax.random.uniform(k_w, (d_out, d_in), jnp.float32, -bound, bound)
    b = jax.random.uniform(k_b, (d_out,), jnp.float32, -bound, bound)
    gamma = 1.0 + 0.1 * jax.random.normal(k_g, (d_out,), jnp.float32)
    beta = 0.1 * jax.random.normal(k_be, (d_out,), jnp.float32)
    run_mean = 0.1 * jax.random.normal(k_m, (d_out,), jnp.float32)
    run_var = 1.0 + 0.1 * jnp.abs(jax.random.normal(k_v, (d_out,), jnp.float32))
    scale = gamma / jnp.sqrt(run_var + eps)            # eval-mode BN fold
    wt = (w * scale[:, None]).T                        # [d_in, d_out]
    bb = b * scale + (beta - run_mean * scale)
    return wt, bb


def _pad_layer(wt, bb):
    """Per-layer padding to lane-dense multiples of 128; weight cast to bf16."""
    din_pad = _round_up(wt.shape[0], _LANE)
    dout_pad = _round_up(wt.shape[1], _LANE)
    wp = jnp.zeros((din_pad, dout_pad), jnp.float32)
    wp = wp.at[: wt.shape[0], : wt.shape[1]].set(wt).astype(jnp.bfloat16)
    bp = jnp.zeros((1, dout_pad), jnp.float32).at[0, : bb.shape[0]].set(bb)
    return wp, bp


def build_vae_params(dims, seed=42):
    hidden_len = len(dims)
    if hidden_len - 1 <= 1:
        raise ValueError(
            "The length of hidden_dim at least is 2, but get {0}.".format(hidden_len - 1))
    key = jax.random.PRNGKey(seed)

    def next_key():
        nonlocal key
        key, sub = jax.random.split(key)
        return sub

    enc_shapes = [(dims[0], dims[1])] + [(dims[i - 1], dims[i])
                                         for i in range(2, hidden_len - 1)]
    dec_shapes = ([(dims[-1], dims[-2])] +
                  [(dims[-i], dims[-i - 1]) for i in range(2, hidden_len - 1)] +
                  [(dims[1], dims[0])])

    enc = [_make_linear_bn(next_key(), di, do) for di, do in enc_shapes]
    wm, bm = _make_linear_bn(next_key(), dims[-2], dims[-1])
    wv, bv = _make_linear_bn(next_key(), dims[-2], dims[-1])
    dec = [_make_linear_bn(next_key(), di, do) for di, do in dec_shapes]

    ordered = enc + [(wm, bm), (wv, bv)] + dec
    return {
        "dims": tuple(int(d) for d in dims),
        "n_enc": len(enc), "n_dec": len(dec),
        # Unpadded folded params (used by the pure-JAX reference).
        "enc": enc, "mean": (wm, bm), "log_var": (wv, bv), "dec": dec,
        # Per-layer padded, pre-transposed, bf16 operands for the fused kernel.
        "layers_padded": [_pad_layer(w, b) for w, b in ordered],
    }


def _vmem_capacity_bytes():
    """Physical per-core VMEM; conservative v7x default if unqueryable."""
    try:
        info = pltpu.get_tpu_info()
        for attr in ("vmem_capacity_bytes", "vmem_size_bytes", "vmem_bytes"):
            v = getattr(info, attr, None)
            if v:
                return int(v)
    except Exception:
        pass
    return 64 << 20


# ---------------------------------------------------------------------------
# Wrapper: one fused pallas_call for the whole VAE.forward.
# ---------------------------------------------------------------------------
def vae_forward(params, x, key):
    """Eval-mode VAE forward. Returns (mean, log_var, z, recon_x)."""
    dims = params["dims"]
    n_enc, n_dec = params["n_enc"], params["n_dec"]
    layers = params["layers_padded"]
    b = x.shape[0]
    d_in, d_lat = dims[0], dims[-1]
    d_in_pad = _round_up(d_in, _LANE)
    d_lat_pad = _round_up(d_lat, _LANE)

    vmem_cap = _vmem_capacity_bytes()
    # Batch tiling: >=2 tiles when batch is big enough (v7x 2-TC sharding via
    # "parallel"); bigger tiles on 128-MiB parts; keep last tile nearly full.
    tile_cap = 512 if vmem_cap >= (96 << 20) else 256
    if b <= 2 * _SUBLANE:
        n_tiles = 1
    else:
        n_tiles = max(2, _cdiv(b, tile_cap))
    tile_b = _round_up(_cdiv(b, n_tiles), _SUBLANE)
    b_pad = n_tiles * tile_b

    # eps ~ N(0,1) for the reparameterization trick (torch.randn_like equiv).
    eps = jax.random.normal(key, (b, d_lat), jnp.float32)

    x_p = jnp.zeros((b_pad, d_in_pad), jnp.float32).at[:b, :d_in].set(
        x.astype(jnp.float32))
    eps_p = jnp.zeros((b_pad, d_lat_pad), jnp.float32).at[:b, :d_lat].set(eps)

    grid = (n_tiles,)
    x_spec = pl.BlockSpec((tile_b, d_in_pad), lambda i: (i, 0))
    eps_spec = pl.BlockSpec((tile_b, d_lat_pad), lambda i: (i, 0))
    lat_spec = pl.BlockSpec((tile_b, d_lat_pad), lambda i: (i, 0))
    rec_spec = pl.BlockSpec((tile_b, d_in_pad), lambda i: (i, 0))

    in_specs = [x_spec, eps_spec]
    operands = [x_p, eps_p]
    for wp, bp in layers:
        in_specs.append(pl.BlockSpec(wp.shape, lambda i: (0, 0)))
        in_specs.append(pl.BlockSpec(bp.shape, lambda i: (0, 0)))
        operands.extend([wp, bp])

    out_specs = [lat_spec, lat_spec, lat_spec, rec_spec]
    out_shape = [jax.ShapeDtypeStruct((b_pad, d_lat_pad), jnp.float32),
                 jax.ShapeDtypeStruct((b_pad, d_lat_pad), jnp.float32),
                 jax.ShapeDtypeStruct((b_pad, d_lat_pad), jnp.float32),
                 jax.ShapeDtypeStruct((b_pad, d_in_pad), jnp.float32)]

    # VMEM budget: resident (double-buffered) bf16 weights + f32 biases,
    # double-buffered I/O tiles, live-activation headroom; capped at ~75% of
    # physical VMEM (≈48 MiB v7x, ≈96 MiB v5e/v6e).
    weight_bytes = sum(wp.size * wp.dtype.itemsize + bp.size * bp.dtype.itemsize
                       for wp, bp in layers)
    max_w = max([d_in_pad, d_lat_pad] + [int(wp.shape[1]) for wp, _ in layers])
    io_bytes = 4 * tile_b * (d_in_pad + d_lat_pad)             # x + eps tiles
    out_bytes = 4 * tile_b * (3 * d_lat_pad + d_in_pad)        # 4 output tiles
    act_bytes = 4 * tile_b * max_w * 4                         # live activations
    need = 2 * (weight_bytes + io_bytes + out_bytes) + act_bytes + (8 << 20)
    vmem_limit = int(min(max(need, 16 << 20), int(vmem_cap * 0.75)))

    cost = pl.CostEstimate(
        flops=2 * b_pad * sum(int(wp.shape[0]) * int(wp.shape[1])
                              for wp, _ in layers),
        transcendentals=b_pad * (d_lat_pad + d_in_pad),        # exp + sigmoid
        bytes_accessed=int(weight_bytes
                           + 4 * b_pad * (d_in_pad + d_lat_pad)
                           + 4 * b_pad * (3 * d_lat_pad + d_in_pad)))

    kernel = functools.partial(_vae_forward_kernel, n_enc=n_enc, n_dec=n_dec)
    mean_p, logvar_p, z_p, recon_p = pl.pallas_call(
        kernel,
        grid=grid,
        in_specs=in_specs,
        out_specs=out_specs,
        out_shape=out_shape,
        compiler_params=pltpu.CompilerParams(
            dimension_semantics=("parallel",),
            vmem_limit_bytes=vmem_limit),
        cost_estimate=cost,
    )(*operands)

    return (mean_p[:b, :d_lat], logvar_p[:b, :d_lat],
            z_p[:b, :d_lat], recon_p[:b, :d_in])


# ---------------------------------------------------------------------------
# Pure-JAX reference (same eval-mode semantics, same bf16 matmul numerics).
# ---------------------------------------------------------------------------
def _reference_forward(params, x, eps):
    bf16, f32 = jnp.bfloat16, jnp.float32

    def layer(h, wt, bb):
        return jnp.dot(h.astype(bf16), wt.astype(bf16),
                       preferred_element_type=f32) + bb

    h = x.astype(f32)
    for wt, bb in params["enc"]:
        h = jnp.maximum(layer(h, wt, bb), 0.0)
    mean = layer(h, *params["mean"])
    log_var = layer(h, *params["log_var"])
    z = mean + eps * jnp.exp(0.5 * log_var)
    h = z
    dec = params["dec"]
    for wt, bb in dec[:-1]:
        h = jnp.maximum(layer(h, wt, bb), 0.0)
    recon = jax.nn.sigmoid(layer(h, *dec[-1]))
    return mean, log_var, z, recon


if __name__ == "__main__":
    dims = [16, 32, 8]          # dims[0]=input features, dims[-1]=latent size
    batch = 8

    params = build_vae_params(dims, seed=42)

    k_x, k_eps = jax.random.split(jax.random.PRNGKey(0))
    x = jax.random.normal(k_x, (batch, dims[0]), jnp.float32)

    # Fused Pallas VAE forward: (mean, log_var, z, recon_x)
    mean, log_var, z, recon = jax.block_until_ready(
        vae_forward(params, x, k_eps))

    # Reference uses the identical eps draw (same key / shape / dtype).
    eps = jax.random.normal(k_eps, (batch, dims[-1]), jnp.float32)
    r_mean, r_lv, r_z, r_recon = _reference_forward(params, x, eps)

    assert mean.shape == (batch, dims[-1])
    assert log_var.shape == (batch, dims[-1])
    assert z.shape == (batch, dims[-1])
    assert recon.shape == (batch, dims[0])
    # bf16 matmul operands -> relaxed tolerance vs the f32 version.
    assert jnp.allclose(mean, r_mean, atol=2e-2, rtol=2e-2)
    assert jnp.allclose(log_var, r_lv, atol=2e-2, rtol=2e-2)
    assert jnp.allclose(z, r_z, atol=2e-2, rtol=2e-2)
    assert jnp.allclose(recon, r_recon, atol=2e-2, rtol=2e-2)

    print("KERNEL_OK")
</pallas_src>

<mosaic_0001>
module attributes {stable_mosaic.version = 11 : i64} {
  func.func @_vae_forward_kernel(%arg0: i32, %arg1: memref<8x128xf32, #tpu.memory_space<vmem>>, %arg2: memref<8x128xf32, #tpu.memory_space<vmem>>, %arg3: memref<128x128xbf16, #tpu.memory_space<vmem>>, %arg4: memref<1x128xf32, #tpu.memory_space<vmem>>, %arg5: memref<128x128xbf16, #tpu.memory_space<vmem>>, %arg6: memref<1x128xf32, #tpu.memory_space<vmem>>, %arg7: memref<128x128xbf16, #tpu.memory_space<vmem>>, %arg8: memref<1x128xf32, #tpu.memory_space<vmem>>, %arg9: memref<128x128xbf16, #tpu.memory_space<vmem>>, %arg10: memref<1x128xf32, #tpu.memory_space<vmem>>, %arg11: memref<128x128xbf16, #tpu.memory_space<vmem>>, %arg12: memref<1x128xf32, #tpu.memory_space<vmem>>, %arg13: memref<8x128xf32, #tpu.memory_space<vmem>>, %arg14: memref<8x128xf32, #tpu.memory_space<vmem>>, %arg15: memref<8x128xf32, #tpu.memory_space<vmem>>, %arg16: memref<8x128xf32, #tpu.memory_space<vmem>>) attributes {dimension_semantics = [#tpu.dimension_semantics<parallel>], iteration_bounds = array<i64: 1>, scalar_prefetch = 0 : i64, scratch_operands = 0 : i64, tpu.core_type = #tpu.core_type<tc>, window_params = [{transform_indices = @transform_0, window_bounds = array<i64: 8, 128>}, {transform_indices = @transform_1, window_bounds = array<i64: 8, 128>}, {pipeline_mode = #tpu.pipeline_mode<synchronous>, transform_indices = @transform_2, window_bounds = array<i64: 128, 128>}, {pipeline_mode = #tpu.pipeline_mode<synchronous>, transform_indices = @transform_3, window_bounds = array<i64: 1, 128>}, {pipeline_mode = #tpu.pipeline_mode<synchronous>, transform_indices = @transform_4, window_bounds = array<i64: 128, 128>}, {pipeline_mode = #tpu.pipeline_mode<synchronous>, transform_indices = @transform_5, window_bounds = array<i64: 1, 128>}, {pipeline_mode = #tpu.pipeline_mode<synchronous>, transform_indices = @transform_6, window_bounds = array<i64: 128, 128>}, {pipeline_mode = #tpu.pipeline_mode<synchronous>, transform_indices = @transform_7, window_bounds = array<i64: 1, 128>}, {pipeline_mode = #tpu.pipeline_mode<synchronous>, transform_indices = @transform_8, window_bounds = array<i64: 128, 128>}, {pipeline_mode = #tpu.pipeline_mode<synchronous>, transform_indices = @transform_9, window_bounds = array<i64: 1, 128>}, {pipeline_mode = #tpu.pipeline_mode<synchronous>, transform_indices = @transform_10, window_bounds = array<i64: 128, 128>}, {pipeline_mode = #tpu.pipeline_mode<synchronous>, transform_indices = @transform_11, window_bounds = array<i64: 1, 128>}, {transform_indices = @transform_12, window_bounds = array<i64: 8, 128>}, {transform_indices = @transform_13, window_bounds = array<i64: 8, 128>}, {transform_indices = @transform_14, window_bounds = array<i64: 8, 128>}, {transform_indices = @transform_15, window_bounds = array<i64: 8, 128>}]} {
    %c0 = arith.constant 0 : index
    %c0_0 = arith.constant 0 : index
    %0 = vector.load %arg1[%c0, %c0_0] : memref<8x128xf32, #tpu.memory_space<vmem>>, vector<8x128xf32>
    %1 = arith.truncf %0 : vector<8x128xf32> to vector<8x128xbf16>
    %c0_1 = arith.constant 0 : index
    %c0_2 = arith.constant 0 : index
    %2 = vector.load %arg3[%c0_1, %c0_2] : memref<128x128xbf16, #tpu.memory_space<vmem>>, vector<128x128xbf16>
    %cst = arith.constant dense<0.000000e+00> : vector<8x128xf32>
    %3 = tpu.matmul %1, %2, %cst {dimension_numbers = #tpu.dot_dimension_numbers<[1], [0], [0], [1], [0, 0, 1, 1], [], []>} : vector<8x128xbf16>, vector<128x128xbf16>, vector<8x128xf32> -> vector<8x128xf32>
    %c0_3 = arith.constant 0 : index
    %c0_4 = arith.constant 0 : index
    %4 = vector.load %arg4[%c0_3, %c0_4] : memref<1x128xf32, #tpu.memory_space<vmem>>, vector<1x128xf32>
    %5 = vector.broadcast %4 : vector<1x128xf32> to vector<8x128xf32>
    %6 = arith.addf %3, %5 : vector<8x128xf32>
    %cst_5 = arith.constant 0.000000e+00 : f32
    %7 = vector.broadcast %cst_5 : f32 to vector<8x128xf32>
    %8 = arith.maximumf %6, %7 : vector<8x128xf32>
    %9 = arith.truncf %8 : vector<8x128xf32> to vector<8x128xbf16>
    %c0_6 = arith.constant 0 : index
    %c0_7 = arith.constant 0 : index
    %10 = vector.load %arg5[%c0_6, %c0_7] : memref<128x128xbf16, #tpu.memory_space<vmem>>, vector<128x128xbf16>
    %cst_8 = arith.constant dense<0.000000e+00> : vector<8x128xf32>
    %11 = tpu.matmul %9, %10, %cst_8 {dimension_numbers = #tpu.dot_dimension_numbers<[1], [0], [0], [1], [0, 0, 1, 1], [], []>} : vector<8x128xbf16>, vector<128x128xbf16>, vector<8x128xf32> -> vector<8x128xf32>
    %c0_9 = arith.constant 0 : index
    %c0_10 = arith.constant 0 : index
    %12 = vector.load %arg6[%c0_9, %c0_10] : memref<1x128xf32, #tpu.memory_space<vmem>>, vector<1x128xf32>
    %13 = vector.broadcast %12 : vector<1x128xf32> to vector<8x128xf32>
    %14 = arith.addf %11, %13 : vector<8x128xf32>
    %15 = arith.truncf %8 : vector<8x128xf32> to vector<8x128xbf16>
    %c0_11 = arith.constant 0 : index
    %c0_12 = arith.constant 0 : index
    %16 = vector.load %arg7[%c0_11, %c0_12] : memref<128x128xbf16, #tpu.memory_space<vmem>>, vector<128x128xbf16>
    %cst_13 = arith.constant dense<0.000000e+00> : vector<8x128xf32>
    %17 = tpu.matmul %15, %16, %cst_13 {dimension_numbers = #tpu.dot_dimension_numbers<[1], [0], [0], [1], [0, 0, 1, 1], [], []>} : vector<8x128xbf16>, vector<128x128xbf16>, vector<8x128xf32> -> vector<8x128xf32>
    %c0_14 = arith.constant 0 : index
    %c0_15 = arith.constant 0 : index
    %18 = vector.load %arg8[%c0_14, %c0_15] : memref<1x128xf32, #tpu.memory_space<vmem>>, vector<1x128xf32>
    %19 = vector.broadcast %18 : vector<1x128xf32> to vector<8x128xf32>
    %20 = arith.addf %17, %19 : vector<8x128xf32>
    %c0_16 = arith.constant 0 : index
    %c0_17 = arith.constant 0 : index
    %21 = vector.load %arg13[%c0_16, %c0_17] : memref<8x128xf32, #tpu.memory_space<vmem>>, vector<8x128xf32>
    tpu.vector_store %arg13[%c0_16, %c0_17], %14 {strides = array<i32>} : memref<8x128xf32, #tpu.memory_space<vmem>>, vector<8x128xf32>,
    %c0_18 = arith.constant 0 : index
    %c0_19 = arith.constant 0 : index
    %22 = vector.load %arg14[%c0_18, %c0_19] : memref<8x128xf32, #tpu.memory_space<vmem>>, vector<8x128xf32>
    tpu.vector_store %arg14[%c0_18, %c0_19], %20 {strides = array<i32>} : memref<8x128xf32, #tpu.memory_space<vmem>>, vector<8x128xf32>,
    %c0_20 = arith.constant 0 : index
    %c0_21 = arith.constant 0 : index
    %23 = vector.load %arg2[%c0_20, %c0_21] : memref<8x128xf32, #tpu.memory_space<vmem>>, vector<8x128xf32>
    %cst_22 = arith.constant 5.000000e-01 : f32
    %24 = vector.broadcast %cst_22 : f32 to vector<8x128xf32>
    %25 = arith.mulf %24, %20 : vector<8x128xf32>
    %26 = math.exp %25 : vector<8x128xf32>
    %27 = arith.mulf %23, %26 : vector<8x128xf32>
    %28 = arith.addf %14, %27 : vector<8x128xf32>
    %c0_23 = arith.constant 0 : index
    %c0_24 = arith.constant 0 : index
    %29 = vector.load %arg15[%c0_23, %c0_24] : memref<8x128xf32, #tpu.memory_space<vmem>>, vector<8x128xf32>
    tpu.vector_store %arg15[%c0_23, %c0_24], %28 {strides = array<i32>} : memref<8x128xf32, #tpu.memory_space<vmem>>, vector<8x128xf32>,
    %30 = arith.truncf %28 : vector<8x128xf32> to vector<8x128xbf16>
    %c0_25 = arith.constant 0 : index
    %c0_26 = arith.constant 0 : index
    %31 = vector.load %arg9[%c0_25, %c0_26] : memref<128x128xbf16, #tpu.memory_space<vmem>>, vector<128x128xbf16>
    %cst_27 = arith.constant dense<0.000000e+00> : vector<8x128xf32>
    %32 = tpu.matmul %30, %31, %cst_27 {dimension_numbers = #tpu.dot_dimension_numbers<[1], [0], [0], [1], [0, 0, 1, 1], [], []>} : vector<8x128xbf16>, vector<128x128xbf16>, vector<8x128xf32> -> vector<8x128xf32>
    %c0_28 = arith.constant 0 : index
    %c0_29 = arith.constant 0 : index
    %33 = vector.load %arg10[%c0_28, %c0_29] : memref<1x128xf32, #tpu.memory_space<vmem>>, vector<1x128xf32>
    %34 = vector.broadcast %33 : vector<1x128xf32> to vector<8x128xf32>
    %35 = arith.addf %32, %34 : vector<8x128xf32>
    %cst_30 = arith.constant 0.000000e+00 : f32
    %36 = vector.broadcast %cst_30 : f32 to vector<8x128xf32>
    %37 = arith.maximumf %35, %36 : vector<8x128xf32>
    %38 = arith.truncf %37 : vector<8x128xf32> to vector<8x128xbf16>
    %c0_31 = arith.constant 0 : index
    %c0_32 = arith.constant 0 : index
    %39 = vector.load %arg11[%c0_31, %c0_32] : memref<128x128xbf16, #tpu.memory_space<vmem>>, vector<128x128xbf16>
    %cst_33 = arith.constant dense<0.000000e+00> : vector<8x128xf32>
    %40 = tpu.matmul %38, %39, %cst_33 {dimension_numbers = #tpu.dot_dimension_numbers<[1], [0], [0], [1], [0, 0, 1, 1], [], []>} : vector<8x128xbf16>, vector<128x128xbf16>, vector<8x128xf32> -> vector<8x128xf32>
    %c0_34 = arith.constant 0 : index
    %c0_35 = arith.constant 0 : index
    %41 = vector.load %arg12[%c0_34, %c0_35] : memref<1x128xf32, #tpu.memory_space<vmem>>, vector<1x128xf32>
    %42 = vector.broadcast %41 : vector<1x128xf32> to vector<8x128xf32>
    %43 = arith.addf %40, %42 : vector<8x128xf32>
    %44 = arith.negf %43 : vector<8x128xf32>
    %45 = math.exp %44 : vector<8x128xf32>
    %cst_36 = arith.constant 1.000000e+00 : f32
    %46 = vector.broadcast %cst_36 : f32 to vector<8x128xf32>
    %47 = arith.addf %46, %45 : vector<8x128xf32>
    %48 = arith.divf %46, %47 : vector<8x128xf32>
    %c0_37 = arith.constant 0 : index
    %c0_38 = arith.constant 0 : index
    %49 = vector.load %arg16[%c0_37, %c0_38] : memref<8x128xf32, #tpu.memory_space<vmem>>, vector<8x128xf32>
    tpu.vector_store %arg16[%c0_37, %c0_38], %48 {strides = array<i32>} : memref<8x128xf32, #tpu.memory_space<vmem>>, vector<8x128xf32>,
    return
  }
  func.func @transform_0(%arg0: i32) -> (i32, i32) {
    %c0_i32 = arith.constant 0 : i32
    %c0_i32_0 = arith.constant 0 : i32
    return %arg0, %c0_i32 : i32, i32
  }
  func.func @transform_1(%arg0: i32) -> (i32, i32) {
    %c0_i32 = arith.constant 0 : i32
    %c0_i32_0 = arith.constant 0 : i32
    return %arg0, %c0_i32 : i32, i32
  }
  func.func @transform_2(%arg0: i32) -> (i32, i32) {
    %c0_i32 = arith.constant 0 : i32
    %c0_i32_0 = arith.constant 0 : i32
    %c0_i32_1 = arith.constant 0 : i32
    return %c0_i32, %c0_i32_0 : i32, i32
  }
  func.func @transform_3(%arg0: i32) -> (i32, i32) {
    %c0_i32 = arith.constant 0 : i32
    %c0_i32_0 = arith.constant 0 : i32
    %c0_i32_1 = arith.constant 0 : i32
    return %c0_i32, %c0_i32_0 : i32, i32
  }
  func.func @transform_4(%arg0: i32) -> (i32, i32) {
    %c0_i32 = arith.constant 0 : i32
    %c0_i32_0 = arith.constant 0 : i32
    %c0_i32_1 = arith.constant 0 : i32
    return %c0_i32, %c0_i32_0 : i32, i32
  }
  func.func @transform_5(%arg0: i32) -> (i32, i32) {
    %c0_i32 = arith.constant 0 : i32
    %c0_i32_0 = arith.constant 0 : i32
    %c0_i32_1 = arith.constant 0 : i32
    return %c0_i32, %c0_i32_0 : i32, i32
  }
  func.func @transform_6(%arg0: i32) -> (i32, i32) {
    %c0_i32 = arith.constant 0 : i32
    %c0_i32_0 = arith.constant 0 : i32
    %c0_i32_1 = arith.constant 0 : i32
    return %c0_i32, %c0_i32_0 : i32, i32
  }
  func.func @transform_7(%arg0: i32) -> (i32, i32) {
    %c0_i32 = arith.constant 0 : i32
    %c0_i32_0 = arith.constant 0 : i32
    %c0_i32_1 = arith.constant 0 : i32
    return %c0_i32, %c0_i32_0 : i32, i32
  }
  func.func @transform_8(%arg0: i32) -> (i32, i32) {
    %c0_i32 = arith.constant 0 : i32
    %c0_i32_0 = arith.constant 0 : i32
    %c0_i32_1 = arith.constant 0 : i32
    return %c0_i32, %c0_i32_0 : i32, i32
  }
  func.func @transform_9(%arg0: i32) -> (i32, i32) {
    %c0_i32 = arith.constant 0 : i32
    %c0_i32_0 = arith.constant 0 : i32
    %c0_i32_1 = arith.constant 0 : i32
    return %c0_i32, %c0_i32_0 : i32, i32
  }
  func.func @transform_10(%arg0: i32) -> (i32, i32) {
    %c0_i32 = arith.constant 0 : i32
    %c0_i32_0 = arith.constant 0 : i32
    %c0_i32_1 = arith.constant 0 : i32
    return %c0_i32, %c0_i32_0 : i32, i32
  }
  func.func @transform_11(%arg0: i32) -> (i32, i32) {
    %c0_i32 = arith.constant 0 : i32
    %c0_i32_0 = arith.constant 0 : i32
    %c0_i32_1 = arith.constant 0 : i32
    return %c0_i32, %c0_i32_0 : i32, i32
  }
  func.func @transform_12(%arg0: i32) -> (i32, i32) {
    %c0_i32 = arith.constant 0 : i32
    %c0_i32_0 = arith.constant 0 : i32
    return %arg0, %c0_i32 : i32, i32
  }
  func.func @transform_13(%arg0: i32) -> (i32, i32) {
    %c0_i32 = arith.constant 0 : i32
    %c0_i32_0 = arith.constant 0 : i32
    return %arg0, %c0_i32 : i32, i32
  }
  func.func @transform_14(%arg0: i32) -> (i32, i32) {
    %c0_i32 = arith.constant 0 : i32
    %c0_i32_0 = arith.constant 0 : i32
    return %arg0, %c0_i32 : i32, i32
  }
  func.func @transform_15(%arg0: i32) -> (i32, i32) {
    %c0_i32 = arith.constant 0 : i32
    %c0_i32_0 = arith.constant 0 : i32
    return %arg0, %c0_i32 : i32, i32
  }
}

</mosaic_0001>

<llo_original>
// kernel: tpu_custom_call.1
$region0: #{tpu_custom_call.1}
  #allocation0 [shape = 'u32[]', space=smem, size = 0x4, offset = 0x4, fixed_abs, tag = 'smem constant byte address 0x4 - core index']
  #allocation1 [shape = 'u32[144,128]{1,0:T(1,128)}', space=vmem, size = 0x12000, scoped, tag = 'internal scratch']
  %s0 = inlined_call_operand.hbm [shape: f32[8,128], index: 0, kind: input, shape index: {}]
  %s1 = inlined_call_operand.hbm [shape: f32[8,128], index: 1, kind: input, shape index: {}]
  %s2 = inlined_call_operand.hbm [shape: bf16[128,128], index: 2, kind: input, shape index: {}]
  %s3 = inlined_call_operand.vmem [shape: f32[1,128], index: 3, kind: input, shape index: {}]
  %s4 = inlined_call_operand.hbm [shape: bf16[128,128], index: 4, kind: input, shape index: {}]
  %s5 = inlined_call_operand.vmem [shape: f32[1,128], index: 5, kind: input, shape index: {}]
  %s6 = inlined_call_operand.hbm [shape: bf16[128,128], index: 6, kind: input, shape index: {}]
  %s7 = inlined_call_operand.vmem [shape: f32[1,128], index: 7, kind: input, shape index: {}]
  %s8 = inlined_call_operand.hbm [shape: bf16[128,128], index: 8, kind: input, shape index: {}]
  %s9 = inlined_call_operand.vmem [shape: f32[1,128], index: 9, kind: input, shape index: {}]
  %s10 = inlined_call_operand.hbm [shape: bf16[128,128], index: 10, kind: input, shape index: {}]
  %s11 = inlined_call_operand.vmem [shape: f32[1,128], index: 11, kind: input, shape index: {}]
  %s12 = inlined_call_operand.hbm [shape: f32[8,128], index: 12, kind: output, shape index: {0}]
  %s13 = inlined_call_operand.hbm [shape: f32[8,128], index: 13, kind: output, shape index: {1}]
  %s14 = inlined_call_operand.hbm [shape: f32[8,128], index: 14, kind: output, shape index: {2}]
  %s15 = inlined_call_operand.hbm [shape: f32[8,128], index: 15, kind: output, shape index: {3}]
  %16 = xla_tuple %s12, %s13, %s14, %s15
  %s17 = sld [smem:[#allocation0]]
  $region110: #{tpu_custom_call.1} parent=0
    _
  %s19 = ssub.s32 1, %s17
  %s20 = scalar_select 0, %s19, %s17
  $region1: #{tpu_custom_call.1} parent=0
    #allocation2 [shape = 'u8[4096]{0}', space=vmem, size = 0x1000, scoped, tag = 'input window, operand 0, single buffered']
    #allocation3 [shape = 's32[1]{0}', space=sflag, size = 0x4, scoped, tag = 'scoped memory for tpu_custom_call.1']
    #allocation4 [shape = 's32[1]{0}', space=sflag, size = 0x4, scoped, tag = 'scoped memory for tpu_custom_call.1']
    #allocation5 [shape = 'u8[4096]{0}', space=vmem, size = 0x1000, scoped, tag = 'input window, operand 1, single buffered']
    #allocation6 [shape = 's32[1]{0}', space=sflag, size = 0x4, scoped, tag = 'scoped memory for tpu_custom_call.1']
    #allocation7 [shape = 'u8[32768]{0}', space=vmem, size = 0x8000, scoped, tag = 'input window, operand 2, single buffered']
    #allocation8 [shape = 'u8[32768]{0}', space=vmem, size = 0x8000, scoped, tag = 'input window, operand 4, single buffered']
    #allocation9 [shape = 's32[1]{0}', space=sflag, size = 0x4, scoped, tag = 'scoped memory for tpu_custom_call.1']
    #allocation10 [shape = 'u8[32768]{0}', space=vmem, size = 0x8000, scoped, tag = 'input window, operand 6, single buffered']
    #allocation11 [shape = 'u8[32768]{0}', space=vmem, size = 0x8000, scoped, tag = 'input window, operand 8, single buffered']
    #allocation12 [shape = 's32[1]{0}', space=sflag, size = 0x4, scoped, tag = 'scoped memory for tpu_custom_call.1']
    #allocation13 [shape = 'u8[32768]{0}', space=vmem, size = 0x8000, scoped, tag = 'input window, operand 10, single buffered']
    #allocation14 [shape = 'u8[4096]{0}', space=vmem, size = 0x1000, scoped, tag = 'output window, operand 0, single buffered']
    #allocation15 [shape = 'u8[4096]{0}', space=vmem, size = 0x1000, scoped, tag = 'output window, operand 1, single buffered']
    #allocation16 [shape = 's32[1]{0}', space=sflag, size = 0x4, scoped, tag = 'scoped memory for tpu_custom_call.1']
    #allocation17 [shape = 'u8[4096]{0}', space=vmem, size = 0x1000, scoped, tag = 'output window, operand 2, single buffered']
    #allocation18 [shape = 'u8[4096]{0}', space=vmem, size = 0x1000, scoped, tag = 'output window, operand 3, single buffered']
    #allocation19 [shape = 's32[1]{0}', space=sflag, size = 0x4, scoped, tag = 'scoped memory for tpu_custom_call.1']
    %21 = vsyncpa [#allocation3], 0
    %22 = vsyncpa [#allocation6], 0
    %23 = vsyncpa [#allocation9], 0
    %24 = vsyncpa [#allocation12], 0
    %25 = vsyncpa [#allocation4], 0
    %26 = vsyncpa [#allocation16], 0
    %27 = vsyncpa [#allocation19], 0
    // Predicated region
    $region2: #{tpu_custom_call.1} parent=1 // pred_check
      _
    $region3: #{tpu_custom_call.1} parent=1 // pred_check_branch
      %29 = sbr.rel (0) target = $region5
    $region4: #{tpu_custom_call.1} parent=1 // pred_region
      %s31 = ssub.s32 128, 128
      %32 = vsyncadd [#allocation3], %s31
      %s34 = sshll.u32 [#allocation2], 4
      %s35 = int_to_ptr.vmem [resolvable:$true] %s34
      %37 = dma.hbm_to_vmem [thread:$0]  %s0, 128, %s35, [#allocation3]
    $region5: #{tpu_custom_call.1} parent=1 // pred_fallthru
      _
    // Predicated region
    $region6: #{tpu_custom_call.1} parent=1 // pred_check
      _
    $region7: #{tpu_custom_call.1} parent=1 // pred_check_branch
      %39 = sbr.rel (0) target = $region9
    $region8: #{tpu_custom_call.1} parent=1 // pred_region
      %s41 = ssub.s32 128, 128
      %42 = vsyncadd [#allocation6], %s41
      %s44 = sshll.u32 [#allocation5], 4
      %s45 = int_to_ptr.vmem [resolvable:$true] %s44
      %47 = dma.hbm_to_vmem [thread:$0]  %s1, 128, %s45, [#allocation6]
    $region9: #{tpu_custom_call.1} parent=1 // pred_fallthru
      _
    // Predicated region
    $region10: #{tpu_custom_call.1} parent=1 // pred_check
      _
    $region11: #{tpu_custom_call.1} parent=1 // pred_check_branch
      %49 = sbr.rel (0) target = $region13
    $region12: #{tpu_custom_call.1} parent=1 // pred_region
      %s51 = ssub.s32 1024, 1024
      %52 = vsyncadd [#allocation6], %s51
      %s53 = sshll.u32 [#allocation7], 4
      %s54 = int_to_ptr.vmem [resolvable:$true] %s53
      %59 = dma.hbm_to_vmem [thread:$0]  %s2, 1024, %s54, [#allocation6], 64, 64, 4
    $region13: #{tpu_custom_call.1} parent=1 // pred_fallthru
      _
    // Predicated region
    $region14: #{tpu_custom_call.1} parent=1 // pred_check
      _
    $region15: #{tpu_custom_call.1} parent=1 // pred_check_branch
      %61 = sbr.rel (0) target = $region17
    $region16: #{tpu_custom_call.1} parent=1 // pred_region
      _
    $region17: #{tpu_custom_call.1} parent=1 // pred_fallthru
      _
    // Predicated region
    $region18: #{tpu_custom_call.1} parent=1 // pred_check
      _
    $region19: #{tpu_custom_call.1} parent=1 // pred_check_branch
      %63 = sbr.rel (0) target = $region21
    $region20: #{tpu_custom_call.1} parent=1 // pred_region
      %s65 = ssub.s32 1024, 1024
      %66 = vsyncadd [#allocation9], %s65
      %s67 = sshll.u32 [#allocation8], 4
      %s68 = int_to_ptr.vmem [resolvable:$true] %s67
      %73 = dma.hbm_to_vmem [thread:$0]  %s4, 1024, %s68, [#allocation9], 64, 64, 4
    $region21: #{tpu_custom_call.1} parent=1 // pred_fallthru
      _
    // Predicated region
    $region22: #{tpu_custom_call.1} parent=1 // pred_check
      _
    $region23: #{tpu_custom_call.1} parent=1 // pred_check_branch
      %75 = sbr.rel (0) target = $region25
    $region24: #{tpu_custom_call.1} parent=1 // pred_region
      _
    $region25: #{tpu_custom_call.1} parent=1 // pred_fallthru
      _
    // Predicated region
    $region26: #{tpu_custom_call.1} parent=1 // pred_check
      _
    $region27: #{tpu_custom_call.1} parent=1 // pred_check_branch
      %77 = sbr.rel (0) target = $region29
    $region28: #{tpu_custom_call.1} parent=1 // pred_region
      %s79 = ssub.s32 1024, 1024
      %80 = vsyncadd [#allocation9], %s79
      %s81 = sshll.u32 [#allocation10], 4
      %s82 = int_to_ptr.vmem [resolvable:$true] %s81
      %87 = dma.hbm_to_vmem [thread:$0]  %s6, 1024, %s82, [#allocation9], 64, 64, 4
    $region29: #{tpu_custom_call.1} parent=1 // pred_fallthru
      _
    // Predicated region
    $region30: #{tpu_custom_call.1} parent=1 // pred_check
      _
    $region31: #{tpu_custom_call.1} parent=1 // pred_check_branch
      %89 = sbr.rel (0) target = $region33
    $region32: #{tpu_custom_call.1} parent=1 // pred_region
      _
    $region33: #{tpu_custom_call.1} parent=1 // pred_fallthru
      _
    // Predicated region
    $region34: #{tpu_custom_call.1} parent=1 // pred_check
      _
    $region35: #{tpu_custom_call.1} parent=1 // pred_check_branch
      %91 = sbr.rel (0) target = $region37
    $region36: #{tpu_custom_call.1} parent=1 // pred_region
      %s93 = ssub.s32 1024, 1024
      %94 = vsyncadd [#allocation12], %s93
      %s95 = sshll.u32 [#allocation11], 4
      %s96 = int_to_ptr.vmem [resolvable:$true] %s95
      %101 = dma.hbm_to_vmem [thread:$0]  %s8, 1024, %s96, [#allocation12], 64, 64, 4
    $region37: #{tpu_custom_call.1} parent=1 // pred_fallthru
      _
    // Predicated region
    $region38: #{tpu_custom_call.1} parent=1 // pred_check
      _
    $region39: #{tpu_custom_call.1} parent=1 // pred_check_branch
      %103 = sbr.rel (0) target = $region41
    $region40: #{tpu_custom_call.1} parent=1 // pred_region
      _
    $region41: #{tpu_custom_call.1} parent=1 // pred_fallthru
      _
    // Predicated region
    $region42: #{tpu_custom_call.1} parent=1 // pred_check
      _
    $region43: #{tpu_custom_call.1} parent=1 // pred_check_branch
      %105 = sbr.rel (0) target = $region45
    $region44: #{tpu_custom_call.1} parent=1 // pred_region
      %s107 = ssub.s32 1024, 1024
      %108 = vsyncadd [#allocation12], %s107
      %s109 = sshll.u32 [#allocation13], 4
      %s110 = int_to_ptr.vmem [resolvable:$true] %s109
      %115 = dma.hbm_to_vmem [thread:$0]  %s10, 1024, %s110, [#allocation12], 64, 64, 4
    $region45: #{tpu_custom_call.1} parent=1 // pred_fallthru
      _
    // Predicated region
    $region46: #{tpu_custom_call.1} parent=1 // pred_check
      _
    $region47: #{tpu_custom_call.1} parent=1 // pred_check_branch
      %117 = sbr.rel (0) target = $region49
    $region48: #{tpu_custom_call.1} parent=1 // pred_region
      _
    $region49: #{tpu_custom_call.1} parent=1 // pred_fallthru
      _
    // Predicated region
    $region50: #{tpu_custom_call.1} parent=1 // pred_check
      _
    $region51: #{tpu_custom_call.1} parent=1 // pred_check_branch
      %119 = sbr.rel (0) target = $region53
    $region52: #{tpu_custom_call.1} parent=1 // pred_region
      %120 = dma.done [#allocation3], 128
    $region53: #{tpu_custom_call.1} parent=1 // pred_fallthru
      _
    // Predicated region
    $region54: #{tpu_custom_call.1} parent=1 // pred_check
      _
    $region55: #{tpu_custom_call.1} parent=1 // pred_check_branch
      %122 = sbr.rel (0) target = $region57
    $region56: #{tpu_custom_call.1} parent=1 // pred_region
      %123 = dma.done [#allocation6], 128
    $region57: #{tpu_custom_call.1} parent=1 // pred_fallthru
      _
    // Predicated region
    $region58: #{tpu_custom_call.1} parent=1 // pred_check
      _
    $region59: #{tpu_custom_call.1} parent=1 // pred_check_branch
      %125 = sbr.rel (0) target = $region61
    $region60: #{tpu_custom_call.1} parent=1 // pred_region
      %126 = dma.done [#allocation6], 1024
    $region61: #{tpu_custom_call.1} parent=1 // pred_fallthru
      _
    // Predicated region
    $region62: #{tpu_custom_call.1} parent=1 // pred_check
      _
    $region63: #{tpu_custom_call.1} parent=1 // pred_check_branch
      %128 = sbr.rel (0) target = $region65
    $region64: #{tpu_custom_call.1} parent=1 // pred_region
      %129 = dma.done [#allocation9], 1024
    $region65: #{tpu_custom_call.1} parent=1 // pred_fallthru
      _
    // Predicated region
    $region66: #{tpu_custom_call.1} parent=1 // pred_check
      _
    $region67: #{tpu_custom_call.1} parent=1 // pred_check_branch
      %131 = sbr.rel (0) target = $region69
    $region68: #{tpu_custom_call.1} parent=1 // pred_region
      %132 = dma.done [#allocation9], 1024
    $region69: #{tpu_custom_call.1} parent=1 // pred_fallthru
      _
    // Predicated region
    $region70: #{tpu_custom_call.1} parent=1 // pred_check
      _
    $region71: #{tpu_custom_call.1} parent=1 // pred_check_branch
      %134 = sbr.rel (0) target = $region73
    $region72: #{tpu_custom_call.1} parent=1 // pred_region
      %135 = dma.done [#allocation12], 1024
    $region73: #{tpu_custom_call.1} parent=1 // pred_fallthru
      _
    // Predicated region
    $region74: #{tpu_custom_call.1} parent=1 // pred_check
      _
    $region75: #{tpu_custom_call.1} parent=1 // pred_check_branch
      %137 = sbr.rel (0) target = $region77
    $region76: #{tpu_custom_call.1} parent=1 // pred_region
      %138 = dma.done [#allocation12], 1024
    $region77: #{tpu_custom_call.1} parent=1 // pred_fallthru
      _
    %v140 = vld [vmem:[#allocation2] sm:$0xff]
    %v141 = vpack.c.bf16 %v140, %v140
    %v142 = vld [vmem:[#allocation7] sm:$0xf]
    %v143 = vld [vmem:[#allocation7 + $0x4] sm:$0xf]
    %v144 = vld [vmem:[#allocation7 + $0x8] sm:$0xf]
    %v145 = vld [vmem:[#allocation7 + $0xc] sm:$0xf]
    %v146 = vld [vmem:[#allocation7 + $0x10] sm:$0xf]
    %v147 = vld [vmem:[#allocation7 + $0x14] sm:$0xf]
    %v148 = vld [vmem:[#allocation7 + $0x18] sm:$0xf]
    %v149 = vld [vmem:[#allocation7 + $0x1c] sm:$0xf]
    %v150 = vld [vmem:[#allocation7 + $0x20] sm:$0xf]
    %v151 = vld [vmem:[#allocation7 + $0x24] sm:$0xf]
    %v152 = vld [vmem:[#allocation7 + $0x28] sm:$0xf]
    %v153 = vld [vmem:[#allocation7 + $0x2c] sm:$0xf]
    %v154 = vld [vmem:[#allocation7 + $0x30] sm:$0xf]
    %v155 = vld [vmem:[#allocation7 + $0x34] sm:$0xf]
    %v156 = vld [vmem:[#allocation7 + $0x38] sm:$0xf]
    %v157 = vld [vmem:[#allocation7 + $0x3c] sm:$0xf]
    %v158 = vld [vmem:[%s3] sm:$0x1]
    %v160 = vlaneseq
    %v161 = vshrl.u32 %v160, 7
    %v162 = vsub.s32 0, %v161
    %v163 = vrot.slane %v158, %v162
    %v181 = vunpack.c.l.b16 %v142
    %v182 = vunpack.c.l.b16 %v143
    %v183 = vunpack.c.l.b16 %v144
    %v184 = vunpack.c.l.b16 %v145
    %v185 = vunpack.c.l.b16 %v146
    %v186 = vunpack.c.l.b16 %v147
    %v187 = vunpack.c.l.b16 %v148
    %v188 = vunpack.c.l.b16 %v149
    %v189 = vunpack.c.l.b16 %v150
    %v190 = vunpack.c.l.b16 %v151
    %v191 = vunpack.c.l.b16 %v152
    %v192 = vunpack.c.l.b16 %v153
    %v193 = vunpack.c.l.b16 %v154
    %v194 = vunpack.c.l.b16 %v155
    %v195 = vunpack.c.l.b16 %v156
    %v196 = vunpack.c.l.b16 %v157
    %v197 = vpack.c.b16 %v182, %v181
    %v198 = vpack.c.b16 %v184, %v183
    %v199 = vpack.c.b16 %v186, %v185
    %v200 = vpack.c.b16 %v188, %v187
    %v201 = vpack.c.b16 %v190, %v189
    %v202 = vpack.c.b16 %v192, %v191
    %v203 = vpack.c.b16 %v194, %v193
    %v204 = vpack.c.b16 %v196, %v195
    %213 = vmatprep.subr.bf16.mxu0 0
    %214 = vmatpush1.bf16.msra.mxu0 %v197
    %215 = vmatprep.subr.bf16.mxu0 0
    %216 = vmatpush1.bf16.msra.mxu0 %v198
    %217 = vmatprep.subr.bf16.mxu0 0
    %218 = vmatpush1.bf16.msra.mxu0 %v199
    %219 = vmatprep.subr.bf16.mxu0 0
    %220 = vmatpush1.bf16.msra.mxu0 %v200
    %221 = vmatprep.subr.bf16.mxu0 0
    %222 = vmatpush1.bf16.msra.mxu0 %v201
    %223 = vmatprep.subr.bf16.mxu0 0
    %224 = vmatpush1.bf16.msra.mxu0 %v202
    %225 = vmatprep.subr.bf16.mxu0 0
    %226 = vmatpush1.bf16.msra.mxu0 %v203
    %227 = vmatprep.subr.bf16.mxu0 0
    %228 = vmatpush1.bf16.msra.mxu0 %v204
    %229 = vmatprep.subr.bf16.mxu0 0
    %230 = vmatpush1.bf16.msra.mxu0 0
    %231 = vmatprep.subr.bf16.mxu0 0
    %232 = vmatpush1.bf16.msra.mxu0 0
    %233 = vmatprep.subr.bf16.mxu0 0
    %234 = vmatpush1.bf16.msra.mxu0 0
    %235 = vmatprep.subr.bf16.mxu0 0
    %236 = vmatpush1.bf16.msra.mxu0 0
    %237 = vmatprep.subr.bf16.mxu0 0
    %238 = vmatpush1.bf16.msra.mxu0 0
    %239 = vmatprep.subr.bf16.mxu0 0
    %240 = vmatpush1.bf16.msra.mxu0 0
    %241 = vmatprep.subr.bf16.mxu0 0
    %242 = vmatpush1.bf16.msra.mxu0 0
    %243 = vmatprep.subr.bf16.mxu0 0
    %244 = vmatpush1.bf16.msra.mxu0 0
    %245 = vmatprep.mubr.bf16.mxu0 0
    %246 = vmatmul.mubr.bf16.gmra.mrb[0].mxu0 %v141
    %v247 = vpop.f32.mrb[0].mxu0
    %v248 = vadd.f32 %v163, %v247
    %v249 = vpop.f32.mrb[0].mxu0
    %v250 = vpop.f32.mrb[0].mxu0
    %v251 = vpop.f32.mrb[0].mxu0
    %252 = vdwg.mxu0
    %v253 = vmax.f32 %v248, 0.0
    %v254 = vpack.c.bf16 %v253, %v253
    %v255 = vld [vmem:[#allocation8] sm:$0xf]
    %v256 = vld [vmem:[#allocation8 + $0x4] sm:$0xf]
    %v257 = vld [vmem:[#allocation8 + $0x8] sm:$0xf]
    %v258 = vld [vmem:[#allocation8 + $0xc] sm:$0xf]
    %v259 = vld [vmem:[#allocation8 + $0x10] sm:$0xf]
    %v260 = vld [vmem:[#allocation8 + $0x14] sm:$0xf]
    %v261 = vld [vmem:[#allocation8 + $0x18] sm:$0xf]
    %v262 = vld [vmem:[#allocation8 + $0x1c] sm:$0xf]
    %v263 = vld [vmem:[#allocation8 + $0x20] sm:$0xf]
    %v264 = vld [vmem:[#allocation8 + $0x24] sm:$0xf]
    %v265 = vld [vmem:[#allocation8 + $0x28] sm:$0xf]
    %v266 = vld [vmem:[#allocation8 + $0x2c] sm:$0xf]
    %v267 = vld [vmem:[#allocation8 + $0x30] sm:$0xf]
    %v268 = vld [vmem:[#allocation8 + $0x34] sm:$0xf]
    %v269 = vld [vmem:[#allocation8 + $0x38] sm:$0xf]
    %v270 = vld [vmem:[#allocation8 + $0x3c] sm:$0xf]
    %v271 = vld [vmem:[%s5] sm:$0x1]
    %v273 = vlaneseq
    %v274 = vshrl.u32 %v273, 7
    %v275 = vsub.s32 0, %v274
    %v276 = vrot.slane %v271, %v275
    %v294 = vunpack.c.l.b16 %v255
    %v295 = vunpack.c.l.b16 %v256
    %v296 = vunpack.c.l.b16 %v257
    %v297 = vunpack.c.l.b16 %v258
    %v298 = vunpack.c.l.b16 %v259
    %v299 = vunpack.c.l.b16 %v260
    %v300 = vunpack.c.l.b16 %v261
    %v301 = vunpack.c.l.b16 %v262
    %v302 = vunpack.c.l.b16 %v263
    %v303 = vunpack.c.l.b16 %v264
    %v304 = vunpack.c.l.b16 %v265
    %v305 = vunpack.c.l.b16 %v266
    %v306 = vunpack.c.l.b16 %v267
    %v307 = vunpack.c.l.b16 %v268
    %v308 = vunpack.c.l.b16 %v269
    %v309 = vunpack.c.l.b16 %v270
    %v310 = vpack.c.b16 %v295, %v294
    %v311 = vpack.c.b16 %v297, %v296
    %v312 = vpack.c.b16 %v299, %v298
    %v313 = vpack.c.b16 %v301, %v300
    %v314 = vpack.c.b16 %v303, %v302
    %v315 = vpack.c.b16 %v305, %v304
    %v316 = vpack.c.b16 %v307, %v306
    %v317 = vpack.c.b16 %v309, %v308
    %326 = vmatprep.subr.bf16.mxu0 0
    %327 = vmatpush1.bf16.msra.mxu0 %v310
    %328 = vmatprep.subr.bf16.mxu0 0
    %329 = vmatpush1.bf16.msra.mxu0 %v311
    %330 = vmatprep.subr.bf16.mxu0 0
    %331 = vmatpush1.bf16.msra.mxu0 %v312
    %332 = vmatprep.subr.bf16.mxu0 0
    %333 = vmatpush1.bf16.msra.mxu0 %v313
    %334 = vmatprep.subr.bf16.mxu0 0
    %335 = vmatpush1.bf16.msra.mxu0 %v314
    %336 = vmatprep.subr.bf16.mxu0 0
    %337 = vmatpush1.bf16.msra.mxu0 %v315
    %338 = vmatprep.subr.bf16.mxu0 0
    %339 = vmatpush1.bf16.msra.mxu0 %v316
    %340 = vmatprep.subr.bf16.mxu0 0
    %341 = vmatpush1.bf16.msra.mxu0 %v317
    %342 = vmatprep.subr.bf16.mxu0 0
    %343 = vmatpush1.bf16.msra.mxu0 0
    %344 = vmatprep.subr.bf16.mxu0 0
    %345 = vmatpush1.bf16.msra.mxu0 0
    %346 = vmatprep.subr.bf16.mxu0 0
    %347 = vmatpush1.bf16.msra.mxu0 0
    %348 = vmatprep.subr.bf16.mxu0 0
    %349 = vmatpush1.bf16.msra.mxu0 0
    %350 = vmatprep.subr.bf16.mxu0 0
    %351 = vmatpush1.bf16.msra.mxu0 0
    %352 = vmatprep.subr.bf16.mxu0 0
    %353 = vmatpush1.bf16.msra.mxu0 0
    %354 = vmatprep.subr.bf16.mxu0 0
    %355 = vmatpush1.bf16.msra.mxu0 0
    %356 = vmatprep.subr.bf16.mxu0 0
    %357 = vmatpush1.bf16.msra.mxu0 0
    %358 = vmatprep.mubr.bf16.mxu0 0
    %359 = vmatmul.mubr.bf16.gmra.mrb[0].mxu0 %v254
    %v360 = vpop.f32.mrb[0].mxu0
    %v361 = vadd.f32 %v276, %v360
    %v362 = vpop.f32.mrb[0].mxu0
    %v363 = vpop.f32.mrb[0].mxu0
    %v364 = vpop.f32.mrb[0].mxu0
    %365 = vdwg.mxu0
    %v366 = vld [vmem:[#allocation10] sm:$0xf]
    %v367 = vld [vmem:[#allocation10 + $0x4] sm:$0xf]
    %v368 = vld [vmem:[#allocation10 + $0x8] sm:$0xf]
    %v369 = vld [vmem:[#allocation10 + $0xc] sm:$0xf]
    %v370 = vld [vmem:[#allocation10 + $0x10] sm:$0xf]
    %v371 = vld [vmem:[#allocation10 + $0x14] sm:$0xf]
    %v372 = vld [vmem:[#allocation10 + $0x18] sm:$0xf]
    %v373 = vld [vmem:[#allocation10 + $0x1c] sm:$0xf]
    %v374 = vld [vmem:[#allocation10 + $0x20] sm:$0xf]
    %v375 = vld [vmem:[#allocation10 + $0x24] sm:$0xf]
    %v376 = vld [vmem:[#allocation10 + $0x28] sm:$0xf]
    %v377 = vld [vmem:[#allocation10 + $0x2c] sm:$0xf]
    %v378 = vld [vmem:[#allocation10 + $0x30] sm:$0xf]
    %v379 = vld [vmem:[#allocation10 + $0x34] sm:$0xf]
    %v380 = vld [vmem:[#allocation10 + $0x38] sm:$0xf]
    %v381 = vld [vmem:[#allocation10 + $0x3c] sm:$0xf]
    %v382 = vld [vmem:[%s7] sm:$0x1]
    %v384 = vlaneseq
    %v385 = vshrl.u32 %v384, 7
    %v386 = vsub.s32 0, %v385
    %v387 = vrot.slane %v382, %v386
    %v405 = vunpack.c.l.b16 %v366
    %v406 = vunpack.c.l.b16 %v367
    %v407 = vunpack.c.l.b16 %v368
    %v408 = vunpack.c.l.b16 %v369
    %v409 = vunpack.c.l.b16 %v370
    %v410 = vunpack.c.l.b16 %v371
    %v411 = vunpack.c.l.b16 %v372
    %v412 = vunpack.c.l.b16 %v373
    %v413 = vunpack.c.l.b16 %v374
    %v414 = vunpack.c.l.b16 %v375
    %v415 = vunpack.c.l.b16 %v376
    %v416 = vunpack.c.l.b16 %v377
    %v417 = vunpack.c.l.b16 %v378
    %v418 = vunpack.c.l.b16 %v379
    %v419 = vunpack.c.l.b16 %v380
    %v420 = vunpack.c.l.b16 %v381
    %v421 = vpack.c.b16 %v406, %v405
    %v422 = vpack.c.b16 %v408, %v407
    %v423 = vpack.c.b16 %v410, %v409
    %v424 = vpack.c.b16 %v412, %v411
    %v425 = vpack.c.b16 %v414, %v413
    %v426 = vpack.c.b16 %v416, %v415
    %v427 = vpack.c.b16 %v418, %v417
    %v428 = vpack.c.b16 %v420, %v419
    %437 = vmatprep.subr.bf16.mxu0 0
    %438 = vmatpush1.bf16.msra.mxu0 %v421
    %439 = vmatprep.subr.bf16.mxu0 0
    %440 = vmatpush1.bf16.msra.mxu0 %v422
    %441 = vmatprep.subr.bf16.mxu0 0
    %442 = vmatpush1.bf16.msra.mxu0 %v423
    %443 = vmatprep.subr.bf16.mxu0 0
    %444 = vmatpush1.bf16.msra.mxu0 %v424
    %445 = vmatprep.subr.bf16.mxu0 0
    %446 = vmatpush1.bf16.msra.mxu0 %v425
    %447 = vmatprep.subr.bf16.mxu0 0
    %448 = vmatpush1.bf16.msra.mxu0 %v426
    %449 = vmatprep.subr.bf16.mxu0 0
    %450 = vmatpush1.bf16.msra.mxu0 %v427
    %451 = vmatprep.subr.bf16.mxu0 0
    %452 = vmatpush1.bf16.msra.mxu0 %v428
    %453 = vmatprep.subr.bf16.mxu0 0
    %454 = vmatpush1.bf16.msra.mxu0 0
    %455 = vmatprep.subr.bf16.mxu0 0
    %456 = vmatpush1.bf16.msra.mxu0 0
    %457 = vmatprep.subr.bf16.mxu0 0
    %458 = vmatpush1.bf16.msra.mxu0 0
    %459 = vmatprep.subr.bf16.mxu0 0
    %460 = vmatpush1.bf16.msra.mxu0 0
    %461 = vmatprep.subr.bf16.mxu0 0
    %462 = vmatpush1.bf16.msra.mxu0 0
    %463 = vmatprep.subr.bf16.mxu0 0
    %464 = vmatpush1.bf16.msra.mxu0 0
    %465 = vmatprep.subr.bf16.mxu0 0
    %466 = vmatpush1.bf16.msra.mxu0 0
    %467 = vmatprep.subr.bf16.mxu0 0
    %468 = vmatpush1.bf16.msra.mxu0 0
    %469 = vmatprep.mubr.bf16.mxu0 0
    %470 = vmatmul.mubr.bf16.gmra.mrb[0].mxu0 %v254
    %v471 = vpop.f32.mrb[0].mxu0
    %v472 = vadd.f32 %v387, %v471
    %v473 = vpop.f32.mrb[0].mxu0
    %v474 = vpop.f32.mrb[0].mxu0
    %v475 = vpop.f32.mrb[0].mxu0
    %476 = vdwg.mxu0
    %477 = vst [vmem:[#allocation14] sm:$0xff] %v361
    %478 = vst [vmem:[#allocation15] sm:$0xff] %v472
    %v479 = vld [vmem:[#allocation5] sm:$0xff]
    %v480 = vmul.f32 %v472, 0.5
    %v481 = vmul.f32 %v480, 1.442695
    %v482 = vpow.pop %v481
    %v483 = vmul.f32 %v479, %v482
    %v484 = vadd.f32 %v361, %v483
    %485 = vst [vmem:[#allocation17] sm:$0xff] %v484
    %v486 = vpack.c.bf16 %v484, %v484
    %v487 = vld [vmem:[#allocation11] sm:$0xf]
    %v488 = vld [vmem:[#allocation11 + $0x4] sm:$0xf]
    %v489 = vld [vmem:[#allocation11 + $0x8] sm:$0xf]
    %v490 = vld [vmem:[#allocation11 + $0xc] sm:$0xf]
    %v491 = vld [vmem:[#allocation11 + $0x10] sm:$0xf]
    %v492 = vld [vmem:[#allocation11 + $0x14] sm:$0xf]
    %v493 = vld [vmem:[#allocation11 + $0x18] sm:$0xf]
    %v494 = vld [vmem:[#allocation11 + $0x1c] sm:$0xf]
    %v495 = vld [vmem:[#allocation11 + $0x20] sm:$0xf]
    %v496 = vld [vmem:[#allocation11 + $0x24] sm:$0xf]
    %v497 = vld [vmem:[#allocation11 + $0x28] sm:$0xf]
    %v498 = vld [vmem:[#allocation11 + $0x2c] sm:$0xf]
    %v499 = vld [vmem:[#allocation11 + $0x30] sm:$0xf]
    %v500 = vld [vmem:[#allocation11 + $0x34] sm:$0xf]
    %v501 = vld [vmem:[#allocation11 + $0x38] sm:$0xf]
    %v502 = vld [vmem:[#allocation11 + $0x3c] sm:$0xf]
    %v503 = vld [vmem:[%s9] sm:$0x1]
    %v505 = vlaneseq
    %v506 = vshrl.u32 %v505, 7
    %v507 = vsub.s32 0, %v506
    %v508 = vrot.slane %v503, %v507
    %v526 = vunpack.c.l.b16 %v487
    %v527 = vunpack.c.l.b16 %v488
    %v528 = vunpack.c.l.b16 %v489
    %v529 = vunpack.c.l.b16 %v490
    %v530 = vunpack.c.l.b16 %v491
    %v531 = vunpack.c.l.b16 %v492
    %v532 = vunpack.c.l.b16 %v493
    %v533 = vunpack.c.l.b16 %v494
    %v534 = vunpack.c.l.b16 %v495
    %v535 = vunpack.c.l.b16 %v496
    %v536 = vunpack.c.l.b16 %v497
    %v537 = vunpack.c.l.b16 %v498
    %v538 = vunpack.c.l.b16 %v499
    %v539 = vunpack.c.l.b16 %v500
    %v540 = vunpack.c.l.b16 %v501
    %v541 = vunpack.c.l.b16 %v502
    %v542 = vpack.c.b16 %v527, %v526
    %v543 = vpack.c.b16 %v529, %v528
    %v544 = vpack.c.b16 %v531, %v530
    %v545 = vpack.c.b16 %v533, %v532
    %v546 = vpack.c.b16 %v535, %v534
    %v547 = vpack.c.b16 %v537, %v536
    %v548 = vpack.c.b16 %v539, %v538
    %v549 = vpack.c.b16 %v541, %v540
    %558 = vmatprep.subr.bf16.mxu0 0
    %559 = vmatpush1.bf16.msra.mxu0 %v542
    %560 = vmatprep.subr.bf16.mxu0 0
    %561 = vmatpush1.bf16.msra.mxu0 %v543
    %562 = vmatprep.subr.bf16.mxu0 0
    %563 = vmatpush1.bf16.msra.mxu0 %v544
    %564 = vmatprep.subr.bf16.mxu0 0
    %565 = vmatpush1.bf16.msra.mxu0 %v545
    %566 = vmatprep.subr.bf16.mxu0 0
    %567 = vmatpush1.bf16.msra.mxu0 %v546
    %568 = vmatprep.subr.bf16.mxu0 0
    %569 = vmatpush1.bf16.msra.mxu0 %v547
    %570 = vmatprep.subr.bf16.mxu0 0
    %571 = vmatpush1.bf16.msra.mxu0 %v548
    %572 = vmatprep.subr.bf16.mxu0 0
    %573 = vmatpush1.bf16.msra.mxu0 %v549
    %574 = vmatprep.subr.bf16.mxu0 0
    %575 = vmatpush1.bf16.msra.mxu0 0
    %576 = vmatprep.subr.bf16.mxu0 0
    %577 = vmatpush1.bf16.msra.mxu0 0
    %578 = vmatprep.subr.bf16.mxu0 0
    %579 = vmatpush1.bf16.msra.mxu0 0
    %580 = vmatprep.subr.bf16.mxu0 0
    %581 = vmatpush1.bf16.msra.mxu0 0
    %582 = vmatprep.subr.bf16.mxu0 0
    %583 = vmatpush1.bf16.msra.mxu0 0
    %584 = vmatprep.subr.bf16.mxu0 0
    %585 = vmatpush1.bf16.msra.mxu0 0
    %586 = vmatprep.subr.bf16.mxu0 0
    %587 = vmatpush1.bf16.msra.mxu0 0
    %588 = vmatprep.subr.bf16.mxu0 0
    %589 = vmatpush1.bf16.msra.mxu0 0
    %590 = vmatprep.mubr.bf16.mxu0 0
    %591 = vmatmul.mubr.bf16.gmra.mrb[0].mxu0 %v486
    %v592 = vpop.f32.mrb[0].mxu0
    %v593 = vadd.f32 %v508, %v592
    %v594 = vpop.f32.mrb[0].mxu0
    %v595 = vpop.f32.mrb[0].mxu0
    %v596 = vpop.f32.mrb[0].mxu0
    %597 = vdwg.mxu0
    %v598 = vmax.f32 %v593, 0.0
    %v599 = vpack.c.bf16 %v598, %v598
    %v600 = vld [vmem:[#allocation13] sm:$0xf]
    %v601 = vld [vmem:[#allocation13 + $0x4] sm:$0xf]
    %v602 = vld [vmem:[#allocation13 + $0x8] sm:$0xf]
    %v603 = vld [vmem:[#allocation13 + $0xc] sm:$0xf]
    %v604 = vld [vmem:[#allocation13 + $0x10] sm:$0xf]
    %v605 = vld [vmem:[#allocation13 + $0x14] sm:$0xf]
    %v606 = vld [vmem:[#allocation13 + $0x18] sm:$0xf]
    %v607 = vld [vmem:[#allocation13 + $0x1c] sm:$0xf]
    %v608 = vld [vmem:[#allocation13 + $0x20] sm:$0xf]
    %v609 = vld [vmem:[#allocation13 + $0x24] sm:$0xf]
    %v610 = vld [vmem:[#allocation13 + $0x28] sm:$0xf]
    %v611 = vld [vmem:[#allocation13 + $0x2c] sm:$0xf]
    %v612 = vld [vmem:[#allocation13 + $0x30] sm:$0xf]
    %v613 = vld [vmem:[#allocation13 + $0x34] sm:$0xf]
    %v614 = vld [vmem:[#allocation13 + $0x38] sm:$0xf]
    %v615 = vld [vmem:[#allocation13 + $0x3c] sm:$0xf]
    %v616 = vld [vmem:[%s11] sm:$0x1]
    %v618 = vlaneseq
    %v619 = vshrl.u32 %v618, 7
    %v620 = vsub.s32 0, %v619
    %v621 = vrot.slane %v616, %v620
    %v639 = vunpack.c.l.b16 %v600
    %v640 = vunpack.c.l.b16 %v601
    %v641 = vunpack.c.l.b16 %v602
    %v642 = vunpack.c.l.b16 %v603
    %v643 = vunpack.c.l.b16 %v604
    %v644 = vunpack.c.l.b16 %v605
    %v645 = vunpack.c.l.b16 %v606
    %v646 = vunpack.c.l.b16 %v607
    %v647 = vunpack.c.l.b16 %v608
    %v648 = vunpack.c.l.b16 %v609
    %v649 = vunpack.c.l.b16 %v610
    %v650 = vunpack.c.l.b16 %v611
    %v651 = vunpack.c.l.b16 %v612
    %v652 = vunpack.c.l.b16 %v613
    %v653 = vunpack.c.l.b16 %v614
    %v654 = vunpack.c.l.b16 %v615
    %v655 = vpack.c.b16 %v640, %v639
    %v656 = vpack.c.b16 %v642, %v641
    %v657 = vpack.c.b16 %v644, %v643
    %v658 = vpack.c.b16 %v646, %v645
    %v659 = vpack.c.b16 %v648, %v647
    %v660 = vpack.c.b16 %v650, %v649
    %v661 = vpack.c.b16 %v652, %v651
    %v662 = vpack.c.b16 %v654, %v653
    %671 = vmatprep.subr.bf16.mxu0 0
    %672 = vmatpush1.bf16.msra.mxu0 %v655
    %673 = vmatprep.subr.bf16.mxu0 0
    %674 = vmatpush1.bf16.msra.mxu0 %v656
    %675 = vmatprep.subr.bf16.mxu0 0
    %676 = vmatpush1.bf16.msra.mxu0 %v657
    %677 = vmatprep.subr.bf16.mxu0 0
    %678 = vmatpush1.bf16.msra.mxu0 %v658
    %679 = vmatprep.subr.bf16.mxu0 0
    %680 = vmatpush1.bf16.msra.mxu0 %v659
    %681 = vmatprep.subr.bf16.mxu0 0
    %682 = vmatpush1.bf16.msra.mxu0 %v660
    %683 = vmatprep.subr.bf16.mxu0 0
    %684 = vmatpush1.bf16.msra.mxu0 %v661
    %685 = vmatprep.subr.bf16.mxu0 0
    %686 = vmatpush1.bf16.msra.mxu0 %v662
    %687 = vmatprep.subr.bf16.mxu0 0
    %688 = vmatpush1.bf16.msra.mxu0 0
    %689 = vmatprep.subr.bf16.mxu0 0
    %690 = vmatpush1.bf16.msra.mxu0 0
    %691 = vmatprep.subr.bf16.mxu0 0
    %692 = vmatpush1.bf16.msra.mxu0 0
    %693 = vmatprep.subr.bf16.mxu0 0
    %694 = vmatpush1.bf16.msra.mxu0 0
    %695 = vmatprep.subr.bf16.mxu0 0
    %696 = vmatpush1.bf16.msra.mxu0 0
    %697 = vmatprep.subr.bf16.mxu0 0
    %698 = vmatpush1.bf16.msra.mxu0 0
    %699 = vmatprep.subr.bf16.mxu0 0
    %700 = vmatpush1.bf16.msra.mxu0 0
    %701 = vmatprep.subr.bf16.mxu0 0
    %702 = vmatpush1.bf16.msra.mxu0 0
    %703 = vmatprep.mubr.bf16.mxu0 0
    %704 = vmatmul.mubr.bf16.gmra.mrb[0].mxu0 %v599
    %v705 = vpop.f32.mrb[0].mxu0
    %v706 = vadd.f32 %v621, %v705
    %v707 = vpop.f32.mrb[0].mxu0
    %v708 = vpop.f32.mrb[0].mxu0
    %v709 = vpop.f32.mrb[0].mxu0
    %710 = vdwg.mxu0
    %v711 = vxor.u32 %v706, 2147483648
    %v712 = vmul.f32 %v711, 1.442695
    %v713 = vpow.pop %v712
    %v714 = vadd.f32 %v713, 1.0
    %v715 = vrcp.pop %v714
    %v716 = vmul.f32 1.0, %v715
    %717 = vst [vmem:[#allocation18] sm:$0xff] %v716
    // Predicated region
    $region78: #{tpu_custom_call.1} parent=1 // pred_check
      _
    $region79: #{tpu_custom_call.1} parent=1 // pred_check_branch
      %719 = sbr.rel (0) target = $region81
    $region80: #{tpu_custom_call.1} parent=1 // pred_region
      %s721 = ssub.s32 128, 128
      %722 = vsyncadd [#allocation4], %s721
      %s724 = sshll.u32 [#allocation14], 4
      %s725 = int_to_ptr.vmem [resolvable:$true] %s724
      %727 = dma.vmem_to_hbm [thread:$0]  %s725, 128, %s12, [#allocation4]
    $region81: #{tpu_custom_call.1} parent=1 // pred_fallthru
      _
    // Predicated region
    $region82: #{tpu_custom_call.1} parent=1 // pred_check
      _
    $region83: #{tpu_custom_call.1} parent=1 // pred_check_branch
      %729 = sbr.rel (0) target = $region85
    $region84: #{tpu_custom_call.1} parent=1 // pred_region
      %s731 = ssub.s32 128, 128
      %732 = vsyncadd [#allocation16], %s731
      %s734 = sshll.u32 [#allocation15], 4
      %s735 = int_to_ptr.vmem [resolvable:$true] %s734
      %737 = dma.vmem_to_hbm [thread:$0]  %s735, 128, %s13, [#allocation16]
    $region85: #{tpu_custom_call.1} parent=1 // pred_fallthru
      _
    // Predicated region
    $region86: #{tpu_custom_call.1} parent=1 // pred_check
      _
    $region87: #{tpu_custom_call.1} parent=1 // pred_check_branch
      %739 = sbr.rel (0) target = $region89
    $region88: #{tpu_custom_call.1} parent=1 // pred_region
      %s741 = ssub.s32 128, 128
      %742 = vsyncadd [#allocation16], %s741
      %s744 = sshll.u32 [#allocation17], 4
      %s745 = int_to_ptr.vmem [resolvable:$true] %s744
      %747 = dma.vmem_to_hbm [thread:$0]  %s745, 128, %s14, [#allocation16]
    $region89: #{tpu_custom_call.1} parent=1 // pred_fallthru
      _
    // Predicated region
    $region90: #{tpu_custom_call.1} parent=1 // pred_check
      _
    $region91: #{tpu_custom_call.1} parent=1 // pred_check_branch
      %749 = sbr.rel (0) target = $region93
    $region92: #{tpu_custom_call.1} parent=1 // pred_region
      %s751 = ssub.s32 128, 128
      %752 = vsyncadd [#allocation19], %s751
      %s754 = sshll.u32 [#allocation18], 4
      %s755 = int_to_ptr.vmem [resolvable:$true] %s754
      %757 = dma.vmem_to_hbm [thread:$0]  %s755, 128, %s15, [#allocation19]
    $region93: #{tpu_custom_call.1} parent=1 // pred_fallthru
      _
    // Predicated region
    $region94: #{tpu_custom_call.1} parent=1 // pred_check
      _
    $region95: #{tpu_custom_call.1} parent=1 // pred_check_branch
      %759 = sbr.rel (0) target = $region97
    $region96: #{tpu_custom_call.1} parent=1 // pred_region
      %760 = dma.done [#allocation4], 128
    $region97: #{tpu_custom_call.1} parent=1 // pred_fallthru
      _
    // Predicated region
    $region98: #{tpu_custom_call.1} parent=1 // pred_check
      _
    $region99: #{tpu_custom_call.1} parent=1 // pred_check_branch
      %762 = sbr.rel (0) target = $region101
    $region100: #{tpu_custom_call.1} parent=1 // pred_region
      %763 = dma.done [#allocation16], 128
    $region101: #{tpu_custom_call.1} parent=1 // pred_fallthru
      _
    // Predicated region
    $region102: #{tpu_custom_call.1} parent=1 // pred_check
      _
    $region103: #{tpu_custom_call.1} parent=1 // pred_check_branch
      %765 = sbr.rel (0) target = $region105
    $region104: #{tpu_custom_call.1} parent=1 // pred_region
      %766 = dma.done [#allocation16], 128
    $region105: #{tpu_custom_call.1} parent=1 // pred_fallthru
      _
    // Predicated region
    $region106: #{tpu_custom_call.1} parent=1 // pred_check
      _
    $region107: #{tpu_custom_call.1} parent=1 // pred_check_branch
      %768 = sbr.rel (0) target = $region109
    $region108: #{tpu_custom_call.1} parent=1 // pred_region
      %769 = dma.done [#allocation19], 128
    $region109: #{tpu_custom_call.1} parent=1 // pred_fallthru
      _
    %770 = vsyncpa [#allocation3], 1
    %771 = vsyncpa [#allocation6], 1
    %772 = vsyncpa [#allocation9], 1
    %773 = vsyncpa [#allocation12], 1
    %774 = vsyncpa [#allocation4], 1
    %775 = vsyncpa [#allocation16], 1
    %776 = vsyncpa [#allocation19], 1

</llo_original>
